<compile_context>
chip_gen: v7x
topology: tpu7x:2x2x1
jax: 0.10.0
libtpu: 0.0.40
codegen_flags: <defaults>
</compile_context>

<pallas_src>
import math

import jax
import jax.numpy as jnp
from jax.experimental import pallas as pl
from jax.experimental.pallas import tpu as pltpu


def _round_up(x, m):
    return ((x + m - 1) // m) * m


def inverse_dynamics_kernel(obs_ref, nobs_ref, w1_ref, b1_ref, w2_ref, b2_ref,
                            o_ref):
    # Build concat([obs, next_obs]) in-VMEM (never touches HBM) and cast to the
    # MXU compute dtype on the VPU; both are free under the MXU-bound kernel.
    x = jnp.concatenate([obs_ref[...], nobs_ref[...]], axis=-1)
    x = x.astype(w1_ref.dtype)
    # Layer 1: one K=2L matmul, f32 accumulation; bias + ReLU in f32 (VPU).
    h = jnp.dot(x, w1_ref[...], preferred_element_type=jnp.float32) + b1_ref[...]
    h = jnp.maximum(h, 0.0)
    # Layer 2: bf16 operands, f32 accumulation, narrow [BM, A] store.
    out = jnp.dot(h.astype(w2_ref.dtype), w2_ref[...],
                  preferred_element_type=jnp.float32) + b2_ref[...]
    o_ref[...] = out.astype(o_ref.dtype)


def prepare_params(params, compute_dtype=jnp.bfloat16):
    """One-time weight prep (cast/reshape) hoisted out of the per-call path."""
    w1, b1, w2, b2 = params                       # w1: [2L,H], w2: [H,A]
    H = w1.shape[1]
    A = w2.shape[1]
    return (w1.astype(compute_dtype),
            jnp.asarray(b1, jnp.float32).reshape(1, H),
            w2.astype(compute_dtype),
            jnp.asarray(b2, jnp.float32).reshape(1, A))


def _choose_bm(B, block_batch):
    if B > block_batch:
        return block_batch                        # multiple of 16 by default
    if B >= 512:
        # Two roughly even tiles so v7x's second TensorCore gets work
        # (harmless on single-TC v5e/v6e).
        return min(B, _round_up(pl.cdiv(B, 2), 16))
    return B                                      # single block == full dim


def inverse_dynamics_forward(obs, next_obs, prepared_params, *,
                             block_batch=4096):
    """Pallas implementation of InverseDynamicsModel.forward.

    `prepared_params` comes from prepare_params(); obs/next_obs are f32 [B, L].
    """
    w1, b1, w2, b2 = prepared_params
    B, L = obs.shape
    K, H = w1.shape
    A = w2.shape[1]
    assert K == 2 * L, "W1 must have shape [2*latent_dim, hidden]"

    BM = _choose_bm(B, block_batch)
    grid = (pl.cdiv(B, BM),)

    w_itemsize = jnp.dtype(w1.dtype).itemsize
    flops = 2 * B * (2 * L * H + H * A)
    bytes_accessed = (
        2 * B * L * 4                              # f32 activations streamed in
        + (w1.size + w2.size) * w_itemsize         # resident weights
        + (b1.size + b2.size) * 4                  # resident biases
        + B * A * 4                                # f32 output
    )

    return pl.pallas_call(
        inverse_dynamics_kernel,
        out_shape=jax.ShapeDtypeStruct((B, A), jnp.float32),
        grid=grid,
        in_specs=[
            pl.BlockSpec((BM, L), lambda i: (i, 0)),      # obs block (f32)
            pl.BlockSpec((BM, L), lambda i: (i, 0)),      # next_obs block (f32)
            pl.BlockSpec((2 * L, H), lambda i: (0, 0)),   # W1 (resident)
            pl.BlockSpec((1, H), lambda i: (0, 0)),       # b1 (resident)
            pl.BlockSpec((H, A), lambda i: (0, 0)),       # W2 (resident)
            pl.BlockSpec((1, A), lambda i: (0, 0)),       # b2 (resident)
        ],
        out_specs=pl.BlockSpec((BM, A), lambda i: (i, 0)),
        compiler_params=pltpu.CompilerParams(
            dimension_semantics=("parallel",)),
        cost_estimate=pl.CostEstimate(
            flops=flops, transcendentals=0, bytes_accessed=bytes_accessed),
    )(obs, next_obs, w1, b1, w2, b2)


def init_params(key, latent_dim, action_dim, hidden=256):
    """Matches torch default_layer_init: uniform(-1/sqrt(fan_in), 1/sqrt(fan_in))."""
    k1, k2, k3, k4 = jax.random.split(key, 4)
    in1 = 2 * latent_dim
    stdv1 = 1.0 / math.sqrt(in1)
    stdv2 = 1.0 / math.sqrt(hidden)
    # Stored as [in_features, out_features] (torch weight transposed).
    w1 = jax.random.uniform(k1, (in1, hidden), jnp.float32, -stdv1, stdv1)
    b1 = jax.random.uniform(k2, (hidden,), jnp.float32, -stdv1, stdv1)
    w2 = jax.random.uniform(k3, (hidden, action_dim), jnp.float32, -stdv2, stdv2)
    b2 = jax.random.uniform(k4, (action_dim,), jnp.float32, -stdv2, stdv2)
    return (w1, b1, w2, b2)


def _check(out, obs, next_obs, params):
    w1, b1, w2, b2 = params
    bf = jnp.bfloat16
    # Reference 1: same bf16 math in plain JAX (tight tolerance).
    x = jnp.concatenate([obs, next_obs], axis=1)
    h_ref = jnp.dot(x.astype(bf), w1.astype(bf),
                    preferred_element_type=jnp.float32) + b1.reshape(1, -1)
    h_ref = jnp.maximum(h_ref, 0.0)
    ref_bf16 = jnp.dot(h_ref.astype(bf), w2.astype(bf),
                       preferred_element_type=jnp.float32) + b2.reshape(1, -1)
    assert jnp.allclose(out, ref_bf16, atol=2e-3, rtol=2e-3)
    # Reference 2: full f32 module semantics (looser tolerance due to bf16 cast).
    ref_f32 = jnp.maximum(x @ w1 + b1, 0.0) @ w2 + b2
    assert jnp.allclose(out, ref_f32, atol=5e-2, rtol=5e-2)


if __name__ == "__main__":
    latent_dim = 32
    action_dim = 8

    key = jax.random.PRNGKey(0)
    kp, ko, kn, ko2, kn2 = jax.random.split(key, 5)

    params = init_params(kp, latent_dim, action_dim)
    prepped = prepare_params(params)              # done once, outside hot path

    # Small batch: single full-extent block.
    batch = 8
    obs = jax.random.normal(ko, (batch, latent_dim), jnp.float32)
    next_obs = jax.random.normal(kn, (batch, latent_dim), jnp.float32)
    out = inverse_dynamics_forward(obs, next_obs, prepped)
    jax.block_until_ready(out)
    assert out.shape == (batch, action_dim)
    _check(out, obs, next_obs, params)

    # Ragged / multi-tile batch: exercises the two-tile (megacore) path and the
    # Pallas-handled boundary block (no wrapper pad / slice).
    batch2 = 600
    obs2 = jax.random.normal(ko2, (batch2, latent_dim), jnp.float32)
    next_obs2 = jax.random.normal(kn2, (batch2, latent_dim), jnp.float32)
    out2 = inverse_dynamics_forward(obs2, next_obs2, prepped)
    jax.block_until_ready(out2)
    assert out2.shape == (batch2, action_dim)
    _check(out2, obs2, next_obs2, params)

    print("KERNEL_OK")
</pallas_src>

<mosaic_0001>
module attributes {stable_mosaic.version = 11 : i64} {
  func.func @inverse_dynamics_kernel(%arg0: i32, %arg1: memref<8x32xf32, #tpu.memory_space<vmem>>, %arg2: memref<8x32xf32, #tpu.memory_space<vmem>>, %arg3: memref<64x256xbf16, #tpu.memory_space<vmem>>, %arg4: memref<1x256xf32, #tpu.memory_space<vmem>>, %arg5: memref<256x8xbf16, #tpu.memory_space<vmem>>, %arg6: memref<1x8xf32, #tpu.memory_space<vmem>>, %arg7: memref<8x8xf32, #tpu.memory_space<vmem>>) attributes {dimension_semantics = [#tpu.dimension_semantics<parallel>], iteration_bounds = array<i64: 1>, scalar_prefetch = 0 : i64, scratch_operands = 0 : i64, tpu.core_type = #tpu.core_type<tc>, window_params = [{transform_indices = @transform_0, window_bounds = array<i64: 8, 32>}, {transform_indices = @transform_1, window_bounds = array<i64: 8, 32>}, {pipeline_mode = #tpu.pipeline_mode<synchronous>, transform_indices = @transform_2, window_bounds = array<i64: 64, 256>}, {pipeline_mode = #tpu.pipeline_mode<synchronous>, transform_indices = @transform_3, window_bounds = array<i64: 1, 256>}, {pipeline_mode = #tpu.pipeline_mode<synchronous>, transform_indices = @transform_4, window_bounds = array<i64: 256, 8>}, {pipeline_mode = #tpu.pipeline_mode<synchronous>, transform_indices = @transform_5, window_bounds = array<i64: 1, 8>}, {transform_indices = @transform_6, window_bounds = array<i64: 8, 8>}]} {
    %c0 = arith.constant 0 : index
    %c0_0 = arith.constant 0 : index
    %0 = vector.load %arg1[%c0, %c0_0] : memref<8x32xf32, #tpu.memory_space<vmem>>, vector<8x32xf32>
    %c0_1 = arith.constant 0 : index
    %c0_2 = arith.constant 0 : index
    %1 = vector.load %arg2[%c0_1, %c0_2] : memref<8x32xf32, #tpu.memory_space<vmem>>, vector<8x32xf32>
    %2 = tpu.concatenate %0, %1 in 1 : vector<8x32xf32>, vector<8x32xf32> -> vector<8x64xf32>
    %3 = arith.truncf %2 : vector<8x64xf32> to vector<8x64xbf16>
    %c0_3 = arith.constant 0 : index
    %c0_4 = arith.constant 0 : index
    %4 = vector.load %arg3[%c0_3, %c0_4] : memref<64x256xbf16, #tpu.memory_space<vmem>>, vector<64x256xbf16>
    %cst = arith.constant dense<0.000000e+00> : vector<8x256xf32>
    %5 = tpu.matmul %3, %4, %cst {dimension_numbers = #tpu.dot_dimension_numbers<[1], [0], [0], [1], [0, 0, 1, 1], [], []>} : vector<8x64xbf16>, vector<64x256xbf16>, vector<8x256xf32> -> vector<8x256xf32>
    %c0_5 = arith.constant 0 : index
    %c0_6 = arith.constant 0 : index
    %6 = vector.load %arg4[%c0_5, %c0_6] : memref<1x256xf32, #tpu.memory_space<vmem>>, vector<1x256xf32>
    %7 = vector.broadcast %6 : vector<1x256xf32> to vector<8x256xf32>
    %8 = arith.addf %5, %7 : vector<8x256xf32>
    %cst_7 = arith.constant 0.000000e+00 : f32
    %9 = vector.broadcast %cst_7 : f32 to vector<8x256xf32>
    %10 = arith.maximumf %8, %9 : vector<8x256xf32>
    %11 = arith.truncf %10 : vector<8x256xf32> to vector<8x256xbf16>
    %c0_8 = arith.constant 0 : index
    %c0_9 = arith.constant 0 : index
    %12 = vector.load %arg5[%c0_8, %c0_9] : memref<256x8xbf16, #tpu.memory_space<vmem>>, vector<256x8xbf16>
    %cst_10 = arith.constant dense<0.000000e+00> : vector<8x8xf32>
    %13 = tpu.matmul %11, %12, %cst_10 {dimension_numbers = #tpu.dot_dimension_numbers<[1], [0], [0], [1], [0, 0, 1, 1], [], []>} : vector<8x256xbf16>, vector<256x8xbf16>, vector<8x8xf32> -> vector<8x8xf32>
    %c0_11 = arith.constant 0 : index
    %c0_12 = arith.constant 0 : index
    %14 = vector.load %arg6[%c0_11, %c0_12] : memref<1x8xf32, #tpu.memory_space<vmem>>, vector<1x8xf32>
    %15 = vector.broadcast %14 : vector<1x8xf32> to vector<8x8xf32>
    %16 = arith.addf %13, %15 : vector<8x8xf32>
    %c0_13 = arith.constant 0 : index
    %c0_14 = arith.constant 0 : index
    %17 = vector.load %arg7[%c0_13, %c0_14] : memref<8x8xf32, #tpu.memory_space<vmem>>, vector<8x8xf32>
    tpu.vector_store %arg7[%c0_13, %c0_14], %16 {strides = array<i32>} : memref<8x8xf32, #tpu.memory_space<vmem>>, vector<8x8xf32>,
    return
  }
  func.func @transform_0(%arg0: i32) -> (i32, i32) {
    %c0_i32 = arith.constant 0 : i32
    %c0_i32_0 = arith.constant 0 : i32
    return %arg0, %c0_i32 : i32, i32
  }
  func.func @transform_1(%arg0: i32) -> (i32, i32) {
    %c0_i32 = arith.constant 0 : i32
    %c0_i32_0 = arith.constant 0 : i32
    return %arg0, %c0_i32 : i32, i32
  }
  func.func @transform_2(%arg0: i32) -> (i32, i32) {
    %c0_i32 = arith.constant 0 : i32
    %c0_i32_0 = arith.constant 0 : i32
    %c0_i32_1 = arith.constant 0 : i32
    return %c0_i32, %c0_i32_0 : i32, i32
  }
  func.func @transform_3(%arg0: i32) -> (i32, i32) {
    %c0_i32 = arith.constant 0 : i32
    %c0_i32_0 = arith.constant 0 : i32
    %c0_i32_1 = arith.constant 0 : i32
    return %c0_i32, %c0_i32_0 : i32, i32
  }
  func.func @transform_4(%arg0: i32) -> (i32, i32) {
    %c0_i32 = arith.constant 0 : i32
    %c0_i32_0 = arith.constant 0 : i32
    %c0_i32_1 = arith.constant 0 : i32
    return %c0_i32, %c0_i32_0 : i32, i32
  }
  func.func @transform_5(%arg0: i32) -> (i32, i32) {
    %c0_i32 = arith.constant 0 : i32
    %c0_i32_0 = arith.constant 0 : i32
    %c0_i32_1 = arith.constant 0 : i32
    return %c0_i32, %c0_i32_0 : i32, i32
  }
  func.func @transform_6(%arg0: i32) -> (i32, i32) {
    %c0_i32 = arith.constant 0 : i32
    %c0_i32_0 = arith.constant 0 : i32
    return %arg0, %c0_i32 : i32, i32
  }
}

</mosaic_0001>

<llo_original>
// kernel: tpu_custom_call.1
$region0: #{tpu_custom_call.1}
  #allocation0 [shape = 'u32[]', space=smem, size = 0x4, offset = 0x4, fixed_abs, tag = 'smem constant byte address 0x4 - core index']
  #allocation1 [shape = 'u32[144,128]{1,0:T(1,128)}', space=vmem, size = 0x12000, scoped, tag = 'internal scratch']
  %s0 = inlined_call_operand.vmem [shape: f32[8,32], index: 0, kind: input, shape index: {}]
  %s1 = inlined_call_operand.vmem [shape: f32[8,32], index: 1, kind: input, shape index: {}]
  %s2 = inlined_call_operand.vmem [shape: bf16[64,256], index: 2, kind: input, shape index: {}]
  %s3 = inlined_call_operand.vmem [shape: f32[1,256], index: 3, kind: input, shape index: {}]
  %s4 = inlined_call_operand.vmem [shape: bf16[256,8], index: 4, kind: input, shape index: {}]
  %s5 = inlined_call_operand.vmem [shape: f32[1,8], index: 5, kind: input, shape index: {}]
  %s6 = inlined_call_operand.hbm [shape: f32[8,8], index: 6, kind: output, shape index: {}]
  %s7 = sld [smem:[#allocation0]]
  $region34: #{tpu_custom_call.1} parent=0
    _
  %s9 = ssub.s32 1, %s7
  %s10 = scalar_select 0, %s9, %s7
  $region1: #{tpu_custom_call.1} parent=0
    #allocation2 [shape = 'u8[4096]{0}', space=vmem, size = 0x1000, scoped, tag = 'output window, operand 0, single buffered']
    #allocation3 [shape = 's32[1]{0}', space=sflag, size = 0x4, scoped, tag = 'scoped memory for tpu_custom_call.1']
    %11 = vsyncpa [#allocation3], 0
    // Predicated region
    $region2: #{tpu_custom_call.1} parent=1 // pred_check
      _
    $region3: #{tpu_custom_call.1} parent=1 // pred_check_branch
      %13 = sbr.rel (0) target = $region5
    $region4: #{tpu_custom_call.1} parent=1 // pred_region
      _
    $region5: #{tpu_custom_call.1} parent=1 // pred_fallthru
      _
    // Predicated region
    $region6: #{tpu_custom_call.1} parent=1 // pred_check
      _
    $region7: #{tpu_custom_call.1} parent=1 // pred_check_branch
      %15 = sbr.rel (0) target = $region9
    $region8: #{tpu_custom_call.1} parent=1 // pred_region
      _
    $region9: #{tpu_custom_call.1} parent=1 // pred_fallthru
      _
    // Predicated region
    $region10: #{tpu_custom_call.1} parent=1 // pred_check
      _
    $region11: #{tpu_custom_call.1} parent=1 // pred_check_branch
      %17 = sbr.rel (0) target = $region13
    $region12: #{tpu_custom_call.1} parent=1 // pred_region
      _
    $region13: #{tpu_custom_call.1} parent=1 // pred_fallthru
      _
    // Predicated region
    $region14: #{tpu_custom_call.1} parent=1 // pred_check
      _
    $region15: #{tpu_custom_call.1} parent=1 // pred_check_branch
      %19 = sbr.rel (0) target = $region17
    $region16: #{tpu_custom_call.1} parent=1 // pred_region
      _
    $region17: #{tpu_custom_call.1} parent=1 // pred_fallthru
      _
    // Predicated region
    $region18: #{tpu_custom_call.1} parent=1 // pred_check
      _
    $region19: #{tpu_custom_call.1} parent=1 // pred_check_branch
      %21 = sbr.rel (0) target = $region21
    $region20: #{tpu_custom_call.1} parent=1 // pred_region
      _
    $region21: #{tpu_custom_call.1} parent=1 // pred_fallthru
      _
    // Predicated region
    $region22: #{tpu_custom_call.1} parent=1 // pred_check
      _
    $region23: #{tpu_custom_call.1} parent=1 // pred_check_branch
      %23 = sbr.rel (0) target = $region25
    $region24: #{tpu_custom_call.1} parent=1 // pred_region
      _
    $region25: #{tpu_custom_call.1} parent=1 // pred_fallthru
      _
    %v25 = vld [vmem:[%s0] sm:$0xff]
    %v26 = vld [vmem:[%s1] sm:$0xff]
    %28 = vrot.lane.b32.xlu0 %v26, 32
    %v29 = vpop.permute.xlu0 %28
    %vm31 = vcmask 261120
    %v32 = vsel %vm31, %v25, %v29
    %v33 = vpack.c.bf16 %v32, %v32
    %v34 = vld [vmem:[%s2] sm:$0xff]
    %v35 = vld [vmem:[%s2 + $0x8] sm:$0xff]
    %v36 = vld [vmem:[%s2 + $0x10] sm:$0xff]
    %v37 = vld [vmem:[%s2 + $0x18] sm:$0xff]
    %v38 = vld [vmem:[%s2 + $0x20] sm:$0xff]
    %v39 = vld [vmem:[%s2 + $0x28] sm:$0xff]
    %v40 = vld [vmem:[%s2 + $0x30] sm:$0xff]
    %v41 = vld [vmem:[%s2 + $0x38] sm:$0xff]
    %v42 = vld [vmem:[%s3] sm:$0x3]
    %v44 = vlaneseq
    %v45 = vshrl.u32 %v44, 7
    %v46 = vsub.s32 0, %v45
    %v47 = vrot.slane %v42, %v46
    %v48 = vlaneseq
    %v49 = vshrl.u32 %v48, 7
    %v50 = vsub.s32 1, %v49
    %v51 = vrot.slane %v42, %v50
    %v62 = vunpack.c.l.b16 %v34
    %v63 = vunpack.c.h.b16 %v34
    %v64 = vunpack.c.l.b16 %v35
    %v65 = vunpack.c.h.b16 %v35
    %v66 = vunpack.c.l.b16 %v36
    %v67 = vunpack.c.h.b16 %v36
    %v68 = vunpack.c.l.b16 %v37
    %v69 = vunpack.c.h.b16 %v37
    %v70 = vunpack.c.l.b16 %v38
    %v71 = vunpack.c.h.b16 %v38
    %v72 = vunpack.c.l.b16 %v39
    %v73 = vunpack.c.h.b16 %v39
    %v74 = vunpack.c.l.b16 %v40
    %v75 = vunpack.c.h.b16 %v40
    %v76 = vunpack.c.l.b16 %v41
    %v77 = vunpack.c.h.b16 %v41
    %v78 = vpack.c.b16 %v64, %v62
    %v79 = vpack.c.b16 %v65, %v63
    %v80 = vpack.c.b16 %v68, %v66
    %v81 = vpack.c.b16 %v69, %v67
    %v82 = vpack.c.b16 %v72, %v70
    %v83 = vpack.c.b16 %v73, %v71
    %v84 = vpack.c.b16 %v76, %v74
    %v85 = vpack.c.b16 %v77, %v75
    %vm94 = vcmask 523264
    %v96 = vsel %vm94, %v33, 0
    %98 = vmatprep.subr.bf16.mxu0 %v79
    %99 = vmatpush1.bf16.msra.mxu0 %v78
    %100 = vmatprep.subr.bf16.mxu0 %v81
    %101 = vmatpush1.bf16.msra.mxu0 %v80
    %102 = vmatprep.subr.bf16.mxu0 %v83
    %103 = vmatpush1.bf16.msra.mxu0 %v82
    %104 = vmatprep.subr.bf16.mxu0 %v85
    %105 = vmatpush1.bf16.msra.mxu0 %v84
    %106 = vmatprep.subr.bf16.mxu0 0
    %107 = vmatpush1.bf16.msra.mxu0 0
    %108 = vmatprep.subr.bf16.mxu0 0
    %109 = vmatpush1.bf16.msra.mxu0 0
    %110 = vmatprep.subr.bf16.mxu0 0
    %111 = vmatpush1.bf16.msra.mxu0 0
    %112 = vmatprep.subr.bf16.mxu0 0
    %113 = vmatpush1.bf16.msra.mxu0 0
    %114 = vmatprep.subr.bf16.mxu0 0
    %115 = vmatpush1.bf16.msra.mxu0 0
    %116 = vmatprep.subr.bf16.mxu0 0
    %117 = vmatpush1.bf16.msra.mxu0 0
    %118 = vmatprep.subr.bf16.mxu0 0
    %119 = vmatpush1.bf16.msra.mxu0 0
    %120 = vmatprep.subr.bf16.mxu0 0
    %121 = vmatpush1.bf16.msra.mxu0 0
    %122 = vmatprep.subr.bf16.mxu0 0
    %123 = vmatpush1.bf16.msra.mxu0 0
    %124 = vmatprep.subr.bf16.mxu0 0
    %125 = vmatpush1.bf16.msra.mxu0 0
    %126 = vmatprep.subr.bf16.mxu0 0
    %127 = vmatpush1.bf16.msra.mxu0 0
    %128 = vmatprep.subr.bf16.mxu0 0
    %129 = vmatpush1.bf16.msra.mxu0 0
    %130 = vmatprep.mubr.bf16.mxu0 0
    %131 = vmatmul.mubr.bf16.gmra.mrb[0].mxu0 %v96
    %v132 = vpop.f32.mrb[0].mxu0
    %v133 = vadd.f32 %v47, %v132
    %v134 = vpop.f32.mrb[0].mxu0
    %v135 = vadd.f32 %v51, %v134
    %v136 = vpop.f32.mrb[0].mxu0
    %v137 = vpop.f32.mrb[0].mxu0
    %138 = vdwg.mxu0
    %v139 = vmax.f32 %v133, 0.0
    %v140 = vmax.f32 %v135, 0.0
    %v141 = vpack.c.bf16 %v139, %v139
    %v142 = vpack.c.bf16 %v140, %v140
    %v143 = vld [vmem:[%s4] sm:$0xf]
    %v144 = vld [vmem:[%s4 + $0x4] sm:$0xf]
    %v145 = vld [vmem:[%s4 + $0x8] sm:$0xf]
    %v146 = vld [vmem:[%s4 + $0xc] sm:$0xf]
    %v147 = vld [vmem:[%s4 + $0x10] sm:$0xf]
    %v148 = vld [vmem:[%s4 + $0x14] sm:$0xf]
    %v149 = vld [vmem:[%s4 + $0x18] sm:$0xf]
    %v150 = vld [vmem:[%s4 + $0x1c] sm:$0xf]
    %v151 = vld [vmem:[%s4 + $0x20] sm:$0xf]
    %v152 = vld [vmem:[%s4 + $0x24] sm:$0xf]
    %v153 = vld [vmem:[%s4 + $0x28] sm:$0xf]
    %v154 = vld [vmem:[%s4 + $0x2c] sm:$0xf]
    %v155 = vld [vmem:[%s4 + $0x30] sm:$0xf]
    %v156 = vld [vmem:[%s4 + $0x34] sm:$0xf]
    %v157 = vld [vmem:[%s4 + $0x38] sm:$0xf]
    %v158 = vld [vmem:[%s4 + $0x3c] sm:$0xf]
    %v159 = vld [vmem:[%s4 + $0x40] sm:$0xf]
    %v160 = vld [vmem:[%s4 + $0x44] sm:$0xf]
    %v161 = vld [vmem:[%s4 + $0x48] sm:$0xf]
    %v162 = vld [vmem:[%s4 + $0x4c] sm:$0xf]
    %v163 = vld [vmem:[%s4 + $0x50] sm:$0xf]
    %v164 = vld [vmem:[%s4 + $0x54] sm:$0xf]
    %v165 = vld [vmem:[%s4 + $0x58] sm:$0xf]
    %v166 = vld [vmem:[%s4 + $0x5c] sm:$0xf]
    %v167 = vld [vmem:[%s4 + $0x60] sm:$0xf]
    %v168 = vld [vmem:[%s4 + $0x64] sm:$0xf]
    %v169 = vld [vmem:[%s4 + $0x68] sm:$0xf]
    %v170 = vld [vmem:[%s4 + $0x6c] sm:$0xf]
    %v171 = vld [vmem:[%s4 + $0x70] sm:$0xf]
    %v172 = vld [vmem:[%s4 + $0x74] sm:$0xf]
    %v173 = vld [vmem:[%s4 + $0x78] sm:$0xf]
    %v174 = vld [vmem:[%s4 + $0x7c] sm:$0xf]
    %v175 = vld [vmem:[%s5] sm:$0x1]
    %v177 = vlaneseq
    %v178 = vshrl.u32 %v177, 7
    %v179 = vsub.s32 0, %v178
    %v180 = vrot.slane %v175, %v179
    %v214 = vunpack.c.l.b16 %v143
    %v215 = vunpack.c.l.b16 %v144
    %v216 = vunpack.c.l.b16 %v145
    %v217 = vunpack.c.l.b16 %v146
    %v218 = vunpack.c.l.b16 %v147
    %v219 = vunpack.c.l.b16 %v148
    %v220 = vunpack.c.l.b16 %v149
    %v221 = vunpack.c.l.b16 %v150
    %v222 = vunpack.c.l.b16 %v151
    %v223 = vunpack.c.l.b16 %v152
    %v224 = vunpack.c.l.b16 %v153
    %v225 = vunpack.c.l.b16 %v154
    %v226 = vunpack.c.l.b16 %v155
    %v227 = vunpack.c.l.b16 %v156
    %v228 = vunpack.c.l.b16 %v157
    %v229 = vunpack.c.l.b16 %v158
    %v230 = vunpack.c.l.b16 %v159
    %v231 = vunpack.c.l.b16 %v160
    %v232 = vunpack.c.l.b16 %v161
    %v233 = vunpack.c.l.b16 %v162
    %v234 = vunpack.c.l.b16 %v163
    %v235 = vunpack.c.l.b16 %v164
    %v236 = vunpack.c.l.b16 %v165
    %v237 = vunpack.c.l.b16 %v166
    %v238 = vunpack.c.l.b16 %v167
    %v239 = vunpack.c.l.b16 %v168
    %v240 = vunpack.c.l.b16 %v169
    %v241 = vunpack.c.l.b16 %v170
    %v242 = vunpack.c.l.b16 %v171
    %v243 = vunpack.c.l.b16 %v172
    %v244 = vunpack.c.l.b16 %v173
    %v245 = vunpack.c.l.b16 %v174
    %v246 = vpack.c.b16 %v215, %v214
    %v247 = vpack.c.b16 %v217, %v216
    %v248 = vpack.c.b16 %v219, %v218
    %v249 = vpack.c.b16 %v221, %v220
    %v250 = vpack.c.b16 %v223, %v222
    %v251 = vpack.c.b16 %v225, %v224
    %v252 = vpack.c.b16 %v227, %v226
    %v253 = vpack.c.b16 %v229, %v228
    %v254 = vpack.c.b16 %v231, %v230
    %v255 = vpack.c.b16 %v233, %v232
    %v256 = vpack.c.b16 %v235, %v234
    %v257 = vpack.c.b16 %v237, %v236
    %v258 = vpack.c.b16 %v239, %v238
    %v259 = vpack.c.b16 %v241, %v240
    %v260 = vpack.c.b16 %v243, %v242
    %v261 = vpack.c.b16 %v245, %v244
    %278 = vmatprep.subr.bf16.mxu0 0
    %279 = vmatpush1.bf16.msra.mxu0 %v246
    %280 = vmatprep.subr.bf16.mxu0 0
    %281 = vmatpush1.bf16.msra.mxu0 %v247
    %282 = vmatprep.subr.bf16.mxu0 0
    %283 = vmatpush1.bf16.msra.mxu0 %v248
    %284 = vmatprep.subr.bf16.mxu0 0
    %285 = vmatpush1.bf16.msra.mxu0 %v249
    %286 = vmatprep.subr.bf16.mxu0 0
    %287 = vmatpush1.bf16.msra.mxu0 %v250
    %288 = vmatprep.subr.bf16.mxu0 0
    %289 = vmatpush1.bf16.msra.mxu0 %v251
    %290 = vmatprep.subr.bf16.mxu0 0
    %291 = vmatpush1.bf16.msra.mxu0 %v252
    %292 = vmatprep.subr.bf16.mxu0 0
    %293 = vmatpush1.bf16.msra.mxu0 %v253
    %294 = vmatprep.subr.bf16.mxu0 0
    %295 = vmatpush1.bf16.msra.mxu0 %v254
    %296 = vmatprep.subr.bf16.mxu0 0
    %297 = vmatpush1.bf16.msra.mxu0 %v255
    %298 = vmatprep.subr.bf16.mxu0 0
    %299 = vmatpush1.bf16.msra.mxu0 %v256
    %300 = vmatprep.subr.bf16.mxu0 0
    %301 = vmatpush1.bf16.msra.mxu0 %v257
    %302 = vmatprep.subr.bf16.mxu0 0
    %303 = vmatpush1.bf16.msra.mxu0 %v258
    %304 = vmatprep.subr.bf16.mxu0 0
    %305 = vmatpush1.bf16.msra.mxu0 %v259
    %306 = vmatprep.subr.bf16.mxu0 0
    %307 = vmatpush1.bf16.msra.mxu0 %v260
    %308 = vmatprep.subr.bf16.mxu0 0
    %309 = vmatpush1.bf16.msra.mxu0 %v261
    %310 = vmatprep.mubr.bf16.mxu0 %v142
    %311 = vmatmul.mubr.bf16.gmra.mrb[0].mxu0 %v141
    %v312 = vpop.f32.mrb[0].mxu0
    %v313 = vadd.f32 %v180, %v312
    %v314 = vpop.f32.mrb[0].mxu0
    %v315 = vpop.f32.mrb[0].mxu0
    %v316 = vpop.f32.mrb[0].mxu0
    %317 = vdwg.mxu0
    %vm318 = vcmask 64512
    %319 = vst.msk [vmem:[#allocation2] sm:$0xff] %vm318, %v313
    // Predicated region
    $region26: #{tpu_custom_call.1} parent=1 // pred_check
      _
    $region27: #{tpu_custom_call.1} parent=1 // pred_check_branch
      %321 = sbr.rel (0) target = $region29
    $region28: #{tpu_custom_call.1} parent=1 // pred_region
      %s323 = ssub.s32 128, 128
      %324 = vsyncadd [#allocation3], %s323
      %s326 = sshll.u32 [#allocation2], 4
      %s327 = int_to_ptr.vmem [resolvable:$true] %s326
      %329 = dma.vmem_to_hbm [thread:$0]  %s327, 128, %s6, [#allocation3]
    $region29: #{tpu_custom_call.1} parent=1 // pred_fallthru
      _
    // Predicated region
    $region30: #{tpu_custom_call.1} parent=1 // pred_check
      _
    $region31: #{tpu_custom_call.1} parent=1 // pred_check_branch
      %331 = sbr.rel (0) target = $region33
    $region32: #{tpu_custom_call.1} parent=1 // pred_region
      %332 = dma.done [#allocation3], 128
    $region33: #{tpu_custom_call.1} parent=1 // pred_fallthru
      _
    %333 = vsyncpa [#allocation3], 1

</llo_original>
